<compile_context>
chip_gen: v5e
topology: v5e:2x2
jax: 0.10.0
libtpu: 0.0.40
codegen_flags: <defaults>
</compile_context>

<pallas_src>
import jax
import jax.numpy as jnp
import numpy as np
from jax import lax
from jax.experimental import pallas as pl
from jax.experimental.pallas import tpu as pltpu

INPUT_SIZE = 1
HIDDEN = 32
OUT_FEATURES = 1
SUBLANES = 8  # f32 sublane count; pad batch up to a multiple of this


def make_rnn_kernel(t_block):
    def rnn_kernel(xp_ref, whh_ref, hall_ref, hlast_ref):
        """One grid step == one block of t_block timesteps.

        xp_ref   : (t_block, Bp, H)  precomputed x @ W_ih.T + (b_ih + b_hh)
        whh_ref  : (H, H)            hidden->hidden weight (pre-transposed)
        hall_ref : (t_block, Bp, H)  hidden trajectory (lane-dense output)
        hlast_ref: (Bp, H)           hidden-state carry / final hidden state
                                     (constant index_map -> resident block)
        """
        tb = pl.program_id(0)

        @pl.when(tb == 0)
        def _():
            hlast_ref[...] = jnp.zeros_like(hlast_ref)

        whh = whh_ref[...]  # loop-invariant; stays in vregs / MXU across steps

        def step(i, h):
            pre = xp_ref[i] + jnp.dot(h, whh,
                                      preferred_element_type=jnp.float32)
            h_new = jnp.tanh(pre)
            hall_ref[i] = h_new
            return h_new

        # Fully unrolled (static trip count): recurrence carried in registers,
        # visible to the scheduler; only the trajectory store hits VMEM.
        h_final = lax.fori_loop(0, t_block, step, hlast_ref[...], unroll=True)
        hlast_ref[...] = h_final

    return rnn_kernel


def _choose_t_block(t, max_block=128):
    """Largest time block <= max_block that divides T (T itself if small)."""
    if t <= max_block:
        return t
    for tb in range(max_block, 0, -1):
        if t % tb == 0:
            return tb
    return 1


def rnn_forward(x, h_state, params):
    """x: (B, T, I) float32.  Returns (y (B, T, 1), h_state (1, B, H))."""
    del h_state  # torch module ignores it (calls self.rnn(x))
    B, T, _ = x.shape
    H = params["w_hh"].shape[0]

    # ---- hoisted (non-recurrent) input projection: one matmul in XLA ----
    bias = (params["b_ih"] + params["b_hh"]).astype(jnp.float32)        # (H,)
    x_proj = jnp.einsum("bti,hi->tbh", x.astype(jnp.float32),
                        params["w_ih"].astype(jnp.float32)) + bias      # (T,B,H)

    # ---- pad batch to a multiple of 8 sublanes (unmasked vector ops) ----
    Bp = ((B + SUBLANES - 1) // SUBLANES) * SUBLANES
    if Bp != B:
        x_proj = jnp.pad(x_proj, ((0, 0), (0, Bp - B), (0, 0)))

    whh_t = params["w_hh"].T.astype(jnp.float32)                        # (H, H)

    t_block = _choose_t_block(T)
    grid = (T // t_block,)

    h_all, h_last = pl.pallas_call(
        make_rnn_kernel(t_block),
        out_shape=(
            jax.ShapeDtypeStruct((T, Bp, H), jnp.float32),
            jax.ShapeDtypeStruct((Bp, H), jnp.float32),
        ),
        grid_spec=pltpu.PrefetchScalarGridSpec(
            num_scalar_prefetch=0,
            grid=grid,
            in_specs=[
                pl.BlockSpec((t_block, Bp, H), lambda tb: (tb, 0, 0)),
                pl.BlockSpec((H, H), lambda tb: (0, 0)),     # VMEM-resident
            ],
            out_specs=(
                pl.BlockSpec((t_block, Bp, H), lambda tb: (tb, 0, 0)),
                pl.BlockSpec((Bp, H), lambda tb: (0, 0)),    # resident carry
            ),
        ),
        compiler_params=pltpu.CompilerParams(
            dimension_semantics=("arbitrary",)),  # sequential recurrence
    )(x_proj, whh_t)

    # ---- hoisted output head: one lane-dense matmul in XLA ----
    h_all = h_all[:, :B, :]                                             # (T,B,H)
    y = jnp.einsum("tbh,oh->bto", h_all,
                   params["w_out"].astype(jnp.float32))
    y = y + params["b_out"].astype(jnp.float32)                         # (B,T,1)
    return y, h_last[:B][None]                                          # (1,B,H)


def init_params(key):
    """Deterministic init matching torch.nn.RNN / nn.Linear shapes."""
    k = 1.0 / np.sqrt(HIDDEN)
    keys = jax.random.split(key, 6)
    u = lambda kk, shape: jax.random.uniform(kk, shape, jnp.float32, -k, k)
    return {
        "w_ih": u(keys[0], (HIDDEN, INPUT_SIZE)),
        "w_hh": u(keys[1], (HIDDEN, HIDDEN)),
        "b_ih": u(keys[2], (HIDDEN,)),
        "b_hh": u(keys[3], (HIDDEN,)),
        "w_out": u(keys[4], (OUT_FEATURES, HIDDEN)),
        "b_out": u(keys[5], (OUT_FEATURES,)),
    }


def rnn_forward_ref(x, params):
    """Pure-JAX reference (lax.scan) for correctness checking."""
    B, T, _ = x.shape
    H = params["w_hh"].shape[0]
    bias = params["b_ih"] + params["b_hh"]

    def step(h, x_t):
        h_new = jnp.tanh(x_t @ params["w_ih"].T + h @ params["w_hh"].T + bias)
        y = h_new @ params["w_out"].T + params["b_out"]
        return h_new, y

    h0 = jnp.zeros((B, H), jnp.float32)
    h_last, ys = jax.lax.scan(step, h0, jnp.transpose(x, (1, 0, 2)))
    return jnp.transpose(ys, (1, 0, 2)), h_last[None]


if __name__ == "__main__":
    key = jax.random.PRNGKey(0)
    kp, kx = jax.random.split(key)
    params = init_params(kp)

    B, T = 2, 8
    # sin(x) input, like the sin->cos fitting task this module is used for
    steps = jnp.linspace(0.0, np.pi, T, dtype=jnp.float32)
    x = jnp.sin(steps)[None, :, None] + 0.01 * jax.random.normal(
        kx, (B, T, INPUT_SIZE), jnp.float32)
    h_state_in = None  # ignored, as in the torch forward()

    y, h_state = rnn_forward(x, h_state_in, params)
    y = jax.block_until_ready(y)
    h_state = jax.block_until_ready(h_state)

    y_ref, h_ref = rnn_forward_ref(x, params)
    np.testing.assert_allclose(np.asarray(y), np.asarray(y_ref),
                               rtol=1e-4, atol=1e-4)
    np.testing.assert_allclose(np.asarray(h_state), np.asarray(h_ref),
                               rtol=1e-4, atol=1e-4)

    assert y.shape == (B, T, 1) and h_state.shape == (1, B, HIDDEN)
    print("KERNEL_OK")
</pallas_src>

<mosaic_0001>
module attributes {stable_mosaic.version = 11 : i64} {
  func.func @rnn_kernel(%arg0: i32, %arg1: memref<8x8x32xf32, #tpu.memory_space<vmem>>, %arg2: memref<32x32xf32, #tpu.memory_space<vmem>>, %arg3: memref<8x8x32xf32, #tpu.memory_space<vmem>>, %arg4: memref<8x32xf32, #tpu.memory_space<vmem>>) attributes {dimension_semantics = [#tpu.dimension_semantics<arbitrary>], iteration_bounds = array<i64: 1>, scalar_prefetch = 0 : i64, scratch_operands = 0 : i64, tpu.core_type = #tpu.core_type<tc>, window_params = [{transform_indices = @transform_0, window_bounds = array<i64: 8, 8, 32>}, {pipeline_mode = #tpu.pipeline_mode<synchronous>, transform_indices = @transform_1, window_bounds = array<i64: 32, 32>}, {transform_indices = @transform_2, window_bounds = array<i64: 8, 8, 32>}, {pipeline_mode = #tpu.pipeline_mode<synchronous>, transform_indices = @transform_3, window_bounds = array<i64: 8, 32>}]} {
    %c0_i32 = arith.constant 0 : i32
    %0 = arith.cmpi eq, %arg0, %c0_i32 : i32
    %1 = arith.extui %0 : i1 to i32
    %c0_i32_0 = arith.constant 0 : i32
    %2 = arith.cmpi ne, %1, %c0_i32_0 : i32
    scf.if %2 {
      %cst_46 = arith.constant 0.000000e+00 : f32
      %86 = vector.broadcast %cst_46 : f32 to vector<8x32xf32>
      %c0_47 = arith.constant 0 : index
      %c0_48 = arith.constant 0 : index
      %87 = vector.load %arg4[%c0_47, %c0_48] : memref<8x32xf32, #tpu.memory_space<vmem>>, vector<8x32xf32>
      tpu.vector_store %arg4[%c0_47, %c0_48], %86 {strides = array<i32>} : memref<8x32xf32, #tpu.memory_space<vmem>>, vector<8x32xf32>,
    } else {
    }
    %c0 = arith.constant 0 : index
    %c0_1 = arith.constant 0 : index
    %3 = vector.load %arg2[%c0, %c0_1] : memref<32x32xf32, #tpu.memory_space<vmem>>, vector<32x32xf32>
    %c0_2 = arith.constant 0 : index
    %c0_3 = arith.constant 0 : index
    %4 = vector.load %arg4[%c0_2, %c0_3] : memref<8x32xf32, #tpu.memory_space<vmem>>, vector<8x32xf32>
    %c0_i32_4 = arith.constant 0 : i32
    %5 = arith.index_cast %c0_i32_4 : i32 to index
    %c0_5 = arith.constant 0 : index
    %c0_6 = arith.constant 0 : index
    %6 = vector.load %arg1[%5, %c0_5, %c0_6] : memref<8x8x32xf32, #tpu.memory_space<vmem>>, vector<1x8x32xf32>
    %7 = vector.shape_cast %6 : vector<1x8x32xf32> to vector<8x32xf32>
    %cst = arith.constant dense<0.000000e+00> : vector<8x32xf32>
    %8 = tpu.matmul %4, %3, %cst {dimension_numbers = #tpu.dot_dimension_numbers<[1], [0], [0], [1], [0, 0, 1, 1], [], []>} : vector<8x32xf32>, vector<32x32xf32>, vector<8x32xf32> -> vector<8x32xf32>
    %9 = arith.addf %7, %8 : vector<8x32xf32>
    %10 = math.tanh %9 : vector<8x32xf32>
    %11 = arith.index_cast %c0_i32_4 : i32 to index
    %c0_7 = arith.constant 0 : index
    %c0_8 = arith.constant 0 : index
    %12 = vector.load %arg3[%11, %c0_7, %c0_8] : memref<8x8x32xf32, #tpu.memory_space<vmem>>, vector<1x8x32xf32>
    %13 = vector.shape_cast %12 : vector<1x8x32xf32> to vector<8x32xf32>
    %14 = vector.shape_cast %10 : vector<8x32xf32> to vector<1x8x32xf32>
    tpu.vector_store %arg3[%11, %c0_7, %c0_8], %14 {strides = array<i32>} : memref<8x8x32xf32, #tpu.memory_space<vmem>>, vector<1x8x32xf32>,
    %c1_i32 = arith.constant 1 : i32
    %15 = arith.index_cast %c1_i32 : i32 to index
    %c0_9 = arith.constant 0 : index
    %c0_10 = arith.constant 0 : index
    %16 = vector.load %arg1[%15, %c0_9, %c0_10] : memref<8x8x32xf32, #tpu.memory_space<vmem>>, vector<1x8x32xf32>
    %17 = vector.shape_cast %16 : vector<1x8x32xf32> to vector<8x32xf32>
    %cst_11 = arith.constant dense<0.000000e+00> : vector<8x32xf32>
    %18 = tpu.matmul %10, %3, %cst_11 {dimension_numbers = #tpu.dot_dimension_numbers<[1], [0], [0], [1], [0, 0, 1, 1], [], []>} : vector<8x32xf32>, vector<32x32xf32>, vector<8x32xf32> -> vector<8x32xf32>
    %19 = arith.addf %17, %18 : vector<8x32xf32>
    %20 = math.tanh %19 : vector<8x32xf32>
    %21 = arith.index_cast %c1_i32 : i32 to index
    %c0_12 = arith.constant 0 : index
    %c0_13 = arith.constant 0 : index
    %22 = vector.load %arg3[%21, %c0_12, %c0_13] : memref<8x8x32xf32, #tpu.memory_space<vmem>>, vector<1x8x32xf32>
    %23 = vector.shape_cast %22 : vector<1x8x32xf32> to vector<8x32xf32>
    %24 = vector.shape_cast %20 : vector<8x32xf32> to vector<1x8x32xf32>
    tpu.vector_store %arg3[%21, %c0_12, %c0_13], %24 {strides = array<i32>} : memref<8x8x32xf32, #tpu.memory_space<vmem>>, vector<1x8x32xf32>,
    %c2_i32 = arith.constant 2 : i32
    %25 = arith.index_cast %c2_i32 : i32 to index
    %c0_14 = arith.constant 0 : index
    %c0_15 = arith.constant 0 : index
    %26 = vector.load %arg1[%25, %c0_14, %c0_15] : memref<8x8x32xf32, #tpu.memory_space<vmem>>, vector<1x8x32xf32>
    %27 = vector.shape_cast %26 : vector<1x8x32xf32> to vector<8x32xf32>
    %cst_16 = arith.constant dense<0.000000e+00> : vector<8x32xf32>
    %28 = tpu.matmul %20, %3, %cst_16 {dimension_numbers = #tpu.dot_dimension_numbers<[1], [0], [0], [1], [0, 0, 1, 1], [], []>} : vector<8x32xf32>, vector<32x32xf32>, vector<8x32xf32> -> vector<8x32xf32>
    %29 = arith.addf %27, %28 : vector<8x32xf32>
    %30 = math.tanh %29 : vector<8x32xf32>
    %31 = arith.index_cast %c2_i32 : i32 to index
    %c0_17 = arith.constant 0 : index
    %c0_18 = arith.constant 0 : index
    %32 = vector.load %arg3[%31, %c0_17, %c0_18] : memref<8x8x32xf32, #tpu.memory_space<vmem>>, vector<1x8x32xf32>
    %33 = vector.shape_cast %32 : vector<1x8x32xf32> to vector<8x32xf32>
    %34 = vector.shape_cast %30 : vector<8x32xf32> to vector<1x8x32xf32>
    tpu.vector_store %arg3[%31, %c0_17, %c0_18], %34 {strides = array<i32>} : memref<8x8x32xf32, #tpu.memory_space<vmem>>, vector<1x8x32xf32>,
    %c3_i32 = arith.constant 3 : i32
    %35 = arith.index_cast %c3_i32 : i32 to index
    %c0_19 = arith.constant 0 : index
    %c0_20 = arith.constant 0 : index
    %36 = vector.load %arg1[%35, %c0_19, %c0_20] : memref<8x8x32xf32, #tpu.memory_space<vmem>>, vector<1x8x32xf32>
    %37 = vector.shape_cast %36 : vector<1x8x32xf32> to vector<8x32xf32>
    %cst_21 = arith.constant dense<0.000000e+00> : vector<8x32xf32>
    %38 = tpu.matmul %30, %3, %cst_21 {dimension_numbers = #tpu.dot_dimension_numbers<[1], [0], [0], [1], [0, 0, 1, 1], [], []>} : vector<8x32xf32>, vector<32x32xf32>, vector<8x32xf32> -> vector<8x32xf32>
    %39 = arith.addf %37, %38 : vector<8x32xf32>
    %40 = math.tanh %39 : vector<8x32xf32>
    %41 = arith.index_cast %c3_i32 : i32 to index
    %c0_22 = arith.constant 0 : index
    %c0_23 = arith.constant 0 : index
    %42 = vector.load %arg3[%41, %c0_22, %c0_23] : memref<8x8x32xf32, #tpu.memory_space<vmem>>, vector<1x8x32xf32>
    %43 = vector.shape_cast %42 : vector<1x8x32xf32> to vector<8x32xf32>
    %44 = vector.shape_cast %40 : vector<8x32xf32> to vector<1x8x32xf32>
    tpu.vector_store %arg3[%41, %c0_22, %c0_23], %44 {strides = array<i32>} : memref<8x8x32xf32, #tpu.memory_space<vmem>>, vector<1x8x32xf32>,
    %c4_i32 = arith.constant 4 : i32
    %45 = arith.index_cast %c4_i32 : i32 to index
    %c0_24 = arith.constant 0 : index
    %c0_25 = arith.constant 0 : index
    %46 = vector.load %arg1[%45, %c0_24, %c0_25] : memref<8x8x32xf32, #tpu.memory_space<vmem>>, vector<1x8x32xf32>
    %47 = vector.shape_cast %46 : vector<1x8x32xf32> to vector<8x32xf32>
    %cst_26 = arith.constant dense<0.000000e+00> : vector<8x32xf32>
    %48 = tpu.matmul %40, %3, %cst_26 {dimension_numbers = #tpu.dot_dimension_numbers<[1], [0], [0], [1], [0, 0, 1, 1], [], []>} : vector<8x32xf32>, vector<32x32xf32>, vector<8x32xf32> -> vector<8x32xf32>
    %49 = arith.addf %47, %48 : vector<8x32xf32>
    %50 = math.tanh %49 : vector<8x32xf32>
    %51 = arith.index_cast %c4_i32 : i32 to index
    %c0_27 = arith.constant 0 : index
    %c0_28 = arith.constant 0 : index
    %52 = vector.load %arg3[%51, %c0_27, %c0_28] : memref<8x8x32xf32, #tpu.memory_space<vmem>>, vector<1x8x32xf32>
    %53 = vector.shape_cast %52 : vector<1x8x32xf32> to vector<8x32xf32>
    %54 = vector.shape_cast %50 : vector<8x32xf32> to vector<1x8x32xf32>
    tpu.vector_store %arg3[%51, %c0_27, %c0_28], %54 {strides = array<i32>} : memref<8x8x32xf32, #tpu.memory_space<vmem>>, vector<1x8x32xf32>,
    %c5_i32 = arith.constant 5 : i32
    %55 = arith.index_cast %c5_i32 : i32 to index
    %c0_29 = arith.constant 0 : index
    %c0_30 = arith.constant 0 : index
    %56 = vector.load %arg1[%55, %c0_29, %c0_30] : memref<8x8x32xf32, #tpu.memory_space<vmem>>, vector<1x8x32xf32>
    %57 = vector.shape_cast %56 : vector<1x8x32xf32> to vector<8x32xf32>
    %cst_31 = arith.constant dense<0.000000e+00> : vector<8x32xf32>
    %58 = tpu.matmul %50, %3, %cst_31 {dimension_numbers = #tpu.dot_dimension_numbers<[1], [0], [0], [1], [0, 0, 1, 1], [], []>} : vector<8x32xf32>, vector<32x32xf32>, vector<8x32xf32> -> vector<8x32xf32>
    %59 = arith.addf %57, %58 : vector<8x32xf32>
    %60 = math.tanh %59 : vector<8x32xf32>
    %61 = arith.index_cast %c5_i32 : i32 to index
    %c0_32 = arith.constant 0 : index
    %c0_33 = arith.constant 0 : index
    %62 = vector.load %arg3[%61, %c0_32, %c0_33] : memref<8x8x32xf32, #tpu.memory_space<vmem>>, vector<1x8x32xf32>
    %63 = vector.shape_cast %62 : vector<1x8x32xf32> to vector<8x32xf32>
    %64 = vector.shape_cast %60 : vector<8x32xf32> to vector<1x8x32xf32>
    tpu.vector_store %arg3[%61, %c0_32, %c0_33], %64 {strides = array<i32>} : memref<8x8x32xf32, #tpu.memory_space<vmem>>, vector<1x8x32xf32>,
    %c6_i32 = arith.constant 6 : i32
    %65 = arith.index_cast %c6_i32 : i32 to index
    %c0_34 = arith.constant 0 : index
    %c0_35 = arith.constant 0 : index
    %66 = vector.load %arg1[%65, %c0_34, %c0_35] : memref<8x8x32xf32, #tpu.memory_space<vmem>>, vector<1x8x32xf32>
    %67 = vector.shape_cast %66 : vector<1x8x32xf32> to vector<8x32xf32>
    %cst_36 = arith.constant dense<0.000000e+00> : vector<8x32xf32>
    %68 = tpu.matmul %60, %3, %cst_36 {dimension_numbers = #tpu.dot_dimension_numbers<[1], [0], [0], [1], [0, 0, 1, 1], [], []>} : vector<8x32xf32>, vector<32x32xf32>, vector<8x32xf32> -> vector<8x32xf32>
    %69 = arith.addf %67, %68 : vector<8x32xf32>
    %70 = math.tanh %69 : vector<8x32xf32>
    %71 = arith.index_cast %c6_i32 : i32 to index
    %c0_37 = arith.constant 0 : index
    %c0_38 = arith.constant 0 : index
    %72 = vector.load %arg3[%71, %c0_37, %c0_38] : memref<8x8x32xf32, #tpu.memory_space<vmem>>, vector<1x8x32xf32>
    %73 = vector.shape_cast %72 : vector<1x8x32xf32> to vector<8x32xf32>
    %74 = vector.shape_cast %70 : vector<8x32xf32> to vector<1x8x32xf32>
    tpu.vector_store %arg3[%71, %c0_37, %c0_38], %74 {strides = array<i32>} : memref<8x8x32xf32, #tpu.memory_space<vmem>>, vector<1x8x32xf32>,
    %c7_i32 = arith.constant 7 : i32
    %75 = arith.index_cast %c7_i32 : i32 to index
    %c0_39 = arith.constant 0 : index
    %c0_40 = arith.constant 0 : index
    %76 = vector.load %arg1[%75, %c0_39, %c0_40] : memref<8x8x32xf32, #tpu.memory_space<vmem>>, vector<1x8x32xf32>
    %77 = vector.shape_cast %76 : vector<1x8x32xf32> to vector<8x32xf32>
    %cst_41 = arith.constant dense<0.000000e+00> : vector<8x32xf32>
    %78 = tpu.matmul %70, %3, %cst_41 {dimension_numbers = #tpu.dot_dimension_numbers<[1], [0], [0], [1], [0, 0, 1, 1], [], []>} : vector<8x32xf32>, vector<32x32xf32>, vector<8x32xf32> -> vector<8x32xf32>
    %79 = arith.addf %77, %78 : vector<8x32xf32>
    %80 = math.tanh %79 : vector<8x32xf32>
    %81 = arith.index_cast %c7_i32 : i32 to index
    %c0_42 = arith.constant 0 : index
    %c0_43 = arith.constant 0 : index
    %82 = vector.load %arg3[%81, %c0_42, %c0_43] : memref<8x8x32xf32, #tpu.memory_space<vmem>>, vector<1x8x32xf32>
    %83 = vector.shape_cast %82 : vector<1x8x32xf32> to vector<8x32xf32>
    %84 = vector.shape_cast %80 : vector<8x32xf32> to vector<1x8x32xf32>
    tpu.vector_store %arg3[%81, %c0_42, %c0_43], %84 {strides = array<i32>} : memref<8x8x32xf32, #tpu.memory_space<vmem>>, vector<1x8x32xf32>,
    %c8_i32 = arith.constant 8 : i32
    %c0_44 = arith.constant 0 : index
    %c0_45 = arith.constant 0 : index
    %85 = vector.load %arg4[%c0_44, %c0_45] : memref<8x32xf32, #tpu.memory_space<vmem>>, vector<8x32xf32>
    tpu.vector_store %arg4[%c0_44, %c0_45], %80 {strides = array<i32>} : memref<8x32xf32, #tpu.memory_space<vmem>>, vector<8x32xf32>,
    return
  }
  func.func @transform_0(%arg0: i32) -> (i32, i32, i32) {
    %c0_i32 = arith.constant 0 : i32
    %c0_i32_0 = arith.constant 0 : i32
    %c0_i32_1 = arith.constant 0 : i32
    return %arg0, %c0_i32, %c0_i32_0 : i32, i32, i32
  }
  func.func @transform_1(%arg0: i32) -> (i32, i32) {
    %c0_i32 = arith.constant 0 : i32
    %c0_i32_0 = arith.constant 0 : i32
    %c0_i32_1 = arith.constant 0 : i32
    return %c0_i32, %c0_i32_0 : i32, i32
  }
  func.func @transform_2(%arg0: i32) -> (i32, i32, i32) {
    %c0_i32 = arith.constant 0 : i32
    %c0_i32_0 = arith.constant 0 : i32
    %c0_i32_1 = arith.constant 0 : i32
    return %arg0, %c0_i32, %c0_i32_0 : i32, i32, i32
  }
  func.func @transform_3(%arg0: i32) -> (i32, i32) {
    %c0_i32 = arith.constant 0 : i32
    %c0_i32_0 = arith.constant 0 : i32
    %c0_i32_1 = arith.constant 0 : i32
    return %c0_i32, %c0_i32_0 : i32, i32
  }
}

</mosaic_0001>

<llo_original>
// kernel: tpu_custom_call.1
$region0: #{tpu_custom_call.1}
  #allocation0 [shape = 'u32[]', space=smem, size = 0x4, offset = 0x4, fixed_abs, tag = 'smem constant byte address 0x4 - core index']
  #allocation1 [shape = 'u32[72,128]{1,0:T(1,128)}', space=vmem, size = 0x9000, scoped, tag = 'internal scratch']
  %s0 = inlined_call_operand.hbm [shape: f32[8,8,32], index: 0, kind: input, shape index: {}]
  %s1 = inlined_call_operand.hbm [shape: f32[32,32], index: 1, kind: input, shape index: {}]
  %s2 = inlined_call_operand.hbm [shape: f32[8,8,32], index: 2, kind: output, shape index: {0}]
  %s3 = inlined_call_operand.hbm [shape: f32[8,32], index: 3, kind: output, shape index: {1}]
  %4 = xla_tuple %s2, %s3
  %s5 = sld [smem:[#allocation0]]
  $region38: #{tpu_custom_call.1} parent=0
    _
  %s7 = ssub.s32 1, %s5
  %s8 = scalar_select 0, %s7, %s5
  $region1: #{tpu_custom_call.1} parent=0
    #allocation2 [shape = 'u8[32768]{0}', space=vmem, size = 0x8000, scoped, tag = 'input window, operand 0, single buffered']
    #allocation3 [shape = 's32[1]{0}', space=sflag, size = 0x4, scoped, tag = 'scoped memory for tpu_custom_call.1']
    #allocation4 [shape = 's32[1]{0}', space=sflag, size = 0x4, scoped, tag = 'scoped memory for tpu_custom_call.1']
    #allocation5 [shape = 'u8[16384]{0}', space=vmem, size = 0x4000, scoped, tag = 'input window, operand 1, single buffered']
    #allocation6 [shape = 's32[1]{0}', space=sflag, size = 0x4, scoped, tag = 'scoped memory for tpu_custom_call.1']
    #allocation7 [shape = 'u8[32768]{0}', space=vmem, size = 0x8000, scoped, tag = 'output window, operand 0, single buffered']
    #allocation8 [shape = 'u8[4096]{0}', space=vmem, size = 0x1000, scoped, tag = 'output window, operand 1, single buffered']
    #allocation9 [shape = 's32[1]{0}', space=sflag, size = 0x4, scoped, tag = 'scoped memory for tpu_custom_call.1']
    %9 = vsyncpa [#allocation3], 0
    %10 = vsyncpa [#allocation6], 0
    %11 = vsyncpa [#allocation4], 0
    %12 = vsyncpa [#allocation9], 0
    // Predicated region
    $region2: #{tpu_custom_call.1} parent=1 // pred_check
      _
    $region3: #{tpu_custom_call.1} parent=1 // pred_check_branch
      %14 = sbr.rel (0) target = $region5
    $region4: #{tpu_custom_call.1} parent=1 // pred_region
      %16 = vsyncadd [#allocation3], 0
      %s17 = sshll.u32 %s0, 4
      %s18 = int_to_ptr.hbm [resolvable:$true] %s17
      %s19 = sshll.u32 [#allocation2], 4
      %s20 = int_to_ptr.vmem [resolvable:$true] %s19
      %25 = dma.hbm_to_vmem [thread:$0]  %s18, 1024, %s20, [#allocation3], 128, 128, 8
    $region5: #{tpu_custom_call.1} parent=1 // pred_fallthru
      _
    // Predicated region
    $region6: #{tpu_custom_call.1} parent=1 // pred_check
      _
    $region7: #{tpu_custom_call.1} parent=1 // pred_check_branch
      %27 = sbr.rel (0) target = $region9
    $region8: #{tpu_custom_call.1} parent=1 // pred_region
      %29 = vsyncadd [#allocation6], 0
      %s30 = sshll.u32 %s1, 4
      %s31 = int_to_ptr.hbm [resolvable:$true] %s30
      %s32 = sshll.u32 [#allocation5], 4
      %s33 = int_to_ptr.vmem [resolvable:$true] %s32
      %38 = dma.hbm_to_vmem [thread:$0]  %s31, 512, %s33, [#allocation6], 128, 128, 8
    $region9: #{tpu_custom_call.1} parent=1 // pred_fallthru
      _
    // Predicated region
    $region10: #{tpu_custom_call.1} parent=1 // pred_check
      _
    $region11: #{tpu_custom_call.1} parent=1 // pred_check_branch
      %40 = sbr.rel (0) target = $region13
    $region12: #{tpu_custom_call.1} parent=1 // pred_region
      %42 = dma.done [#allocation3], 1024
    $region13: #{tpu_custom_call.1} parent=1 // pred_fallthru
      _
    // Predicated region
    $region14: #{tpu_custom_call.1} parent=1 // pred_check
      _
    $region15: #{tpu_custom_call.1} parent=1 // pred_check_branch
      %44 = sbr.rel (0) target = $region17
    $region16: #{tpu_custom_call.1} parent=1 // pred_region
      %46 = dma.done [#allocation6], 512
    $region17: #{tpu_custom_call.1} parent=1 // pred_fallthru
      _
    %p47 = scmp.eq.s32.totalorder 0, 0
    // Predicated region
    $region18: #{tpu_custom_call.1} parent=1 // pred_check
      %p48 = pneg %p47
    $region19: #{tpu_custom_call.1} parent=1 // pred_check_branch
      %50 = sbr.rel (%p48) target = $region21
    $region20: #{tpu_custom_call.1} parent=1 // pred_region
      %vm51 = vcmask 261120
      %52 = vst.msk [vmem:[#allocation8] sm:$0xff] %vm51, 0.0
    $region21: #{tpu_custom_call.1} parent=1 // pred_fallthru
      _
    %v53 = vld [vmem:[#allocation5] sm:$0xff]
    %v54 = vld [vmem:[#allocation5 + $0x8] sm:$0xff]
    %v55 = vld [vmem:[#allocation5 + $0x10] sm:$0xff]
    %v56 = vld [vmem:[#allocation5 + $0x18] sm:$0xff]
    %v57 = vld [vmem:[#allocation8] sm:$0xff]
    %v58 = vld [vmem:[#allocation2] sm:$0xff]
    %vm59 = vcmask 261120
    %v61 = vsel %vm59, %v57, 0
    %63 = vmatpush.msra.mxu0 0.0
    %64 = vmatpush.msra.mxu0 0.0
    %65 = vmatpush.msra.mxu0 0.0
    %66 = vmatpush.msra.mxu0 0.0
    %67 = vmatpush.msra.mxu0 0.0
    %68 = vmatpush.msra.mxu0 0.0
    %69 = vmatpush.msra.mxu0 0.0
    %70 = vmatpush.msra.mxu0 0.0
    %71 = vmatpush.msra.mxu0 0.0
    %72 = vmatpush.msra.mxu0 0.0
    %73 = vmatpush.msra.mxu0 0.0
    %74 = vmatpush.msra.mxu0 0.0
    %75 = vmatpush.msra.mxu0 %v56
    %76 = vmatpush.msra.mxu0 %v55
    %77 = vmatpush.msra.mxu0 %v54
    %78 = vmatpush.msra.mxu0 %v53
    %79 = vmatmul.f32.gmra.mxu0 %v61
    %v80 = vpop.f32.mrf.mxu0
    %v81 = vadd.f32 0.0, %v80
    %82 = vdwg.mxu0
    %v83 = vadd.f32 %v58, %v81
    %v84 = vtanh.pop %v83
    %85 = vst.msk [vmem:[#allocation7] sm:$0xff] %vm59, %v84
    %s86 = scalar_lea.vmem [#allocation2], 8
    %v87 = vld [vmem:[%s86] sm:$0xff]
    %v89 = vsel %vm59, %v84, 0
    %91 = vmatpush.msra.mxu0 0.0
    %92 = vmatpush.msra.mxu0 0.0
    %93 = vmatpush.msra.mxu0 0.0
    %94 = vmatpush.msra.mxu0 0.0
    %95 = vmatpush.msra.mxu0 0.0
    %96 = vmatpush.msra.mxu0 0.0
    %97 = vmatpush.msra.mxu0 0.0
    %98 = vmatpush.msra.mxu0 0.0
    %99 = vmatpush.msra.mxu0 0.0
    %100 = vmatpush.msra.mxu0 0.0
    %101 = vmatpush.msra.mxu0 0.0
    %102 = vmatpush.msra.mxu0 0.0
    %103 = vmatpush.msra.mxu0 %v56
    %104 = vmatpush.msra.mxu0 %v55
    %105 = vmatpush.msra.mxu0 %v54
    %106 = vmatpush.msra.mxu0 %v53
    %107 = vmatmul.f32.gmra.mxu0 %v89
    %v108 = vpop.f32.mrf.mxu0
    %v109 = vadd.f32 0.0, %v108
    %110 = vdwg.mxu0
    %v111 = vadd.f32 %v87, %v109
    %v112 = vtanh.pop %v111
    %s113 = scalar_lea.vmem [#allocation7], 8
    %114 = vst.msk [vmem:[%s113] sm:$0xff] %vm59, %v112
    %s115 = scalar_lea.vmem [#allocation2], 16
    %v116 = vld [vmem:[%s115] sm:$0xff]
    %v118 = vsel %vm59, %v112, 0
    %120 = vmatpush.msra.mxu0 0.0
    %121 = vmatpush.msra.mxu0 0.0
    %122 = vmatpush.msra.mxu0 0.0
    %123 = vmatpush.msra.mxu0 0.0
    %124 = vmatpush.msra.mxu0 0.0
    %125 = vmatpush.msra.mxu0 0.0
    %126 = vmatpush.msra.mxu0 0.0
    %127 = vmatpush.msra.mxu0 0.0
    %128 = vmatpush.msra.mxu0 0.0
    %129 = vmatpush.msra.mxu0 0.0
    %130 = vmatpush.msra.mxu0 0.0
    %131 = vmatpush.msra.mxu0 0.0
    %132 = vmatpush.msra.mxu0 %v56
    %133 = vmatpush.msra.mxu0 %v55
    %134 = vmatpush.msra.mxu0 %v54
    %135 = vmatpush.msra.mxu0 %v53
    %136 = vmatmul.f32.gmra.mxu0 %v118
    %v137 = vpop.f32.mrf.mxu0
    %v138 = vadd.f32 0.0, %v137
    %139 = vdwg.mxu0
    %v140 = vadd.f32 %v116, %v138
    %v141 = vtanh.pop %v140
    %s142 = scalar_lea.vmem [#allocation7], 16
    %143 = vst.msk [vmem:[%s142] sm:$0xff] %vm59, %v141
    %s144 = scalar_lea.vmem [#allocation2], 24
    %v145 = vld [vmem:[%s144] sm:$0xff]
    %v147 = vsel %vm59, %v141, 0
    %149 = vmatpush.msra.mxu0 0.0
    %150 = vmatpush.msra.mxu0 0.0
    %151 = vmatpush.msra.mxu0 0.0
    %152 = vmatpush.msra.mxu0 0.0
    %153 = vmatpush.msra.mxu0 0.0
    %154 = vmatpush.msra.mxu0 0.0
    %155 = vmatpush.msra.mxu0 0.0
    %156 = vmatpush.msra.mxu0 0.0
    %157 = vmatpush.msra.mxu0 0.0
    %158 = vmatpush.msra.mxu0 0.0
    %159 = vmatpush.msra.mxu0 0.0
    %160 = vmatpush.msra.mxu0 0.0
    %161 = vmatpush.msra.mxu0 %v56
    %162 = vmatpush.msra.mxu0 %v55
    %163 = vmatpush.msra.mxu0 %v54
    %164 = vmatpush.msra.mxu0 %v53
    %165 = vmatmul.f32.gmra.mxu0 %v147
    %v166 = vpop.f32.mrf.mxu0
    %v167 = vadd.f32 0.0, %v166
    %168 = vdwg.mxu0
    %v169 = vadd.f32 %v145, %v167
    %v170 = vtanh.pop %v169
    %s171 = scalar_lea.vmem [#allocation7], 24
    %172 = vst.msk [vmem:[%s171] sm:$0xff] %vm59, %v170
    %s173 = scalar_lea.vmem [#allocation2], 32
    %v174 = vld [vmem:[%s173] sm:$0xff]
    %v176 = vsel %vm59, %v170, 0
    %178 = vmatpush.msra.mxu0 0.0
    %179 = vmatpush.msra.mxu0 0.0
    %180 = vmatpush.msra.mxu0 0.0
    %181 = vmatpush.msra.mxu0 0.0
    %182 = vmatpush.msra.mxu0 0.0
    %183 = vmatpush.msra.mxu0 0.0
    %184 = vmatpush.msra.mxu0 0.0
    %185 = vmatpush.msra.mxu0 0.0
    %186 = vmatpush.msra.mxu0 0.0
    %187 = vmatpush.msra.mxu0 0.0
    %188 = vmatpush.msra.mxu0 0.0
    %189 = vmatpush.msra.mxu0 0.0
    %190 = vmatpush.msra.mxu0 %v56
    %191 = vmatpush.msra.mxu0 %v55
    %192 = vmatpush.msra.mxu0 %v54
    %193 = vmatpush.msra.mxu0 %v53
    %194 = vmatmul.f32.gmra.mxu0 %v176
    %v195 = vpop.f32.mrf.mxu0
    %v196 = vadd.f32 0.0, %v195
    %197 = vdwg.mxu0
    %v198 = vadd.f32 %v174, %v196
    %v199 = vtanh.pop %v198
    %s200 = scalar_lea.vmem [#allocation7], 32
    %201 = vst.msk [vmem:[%s200] sm:$0xff] %vm59, %v199
    %s202 = scalar_lea.vmem [#allocation2], 40
    %v203 = vld [vmem:[%s202] sm:$0xff]
    %v205 = vsel %vm59, %v199, 0
    %207 = vmatpush.msra.mxu0 0.0
    %208 = vmatpush.msra.mxu0 0.0
    %209 = vmatpush.msra.mxu0 0.0
    %210 = vmatpush.msra.mxu0 0.0
    %211 = vmatpush.msra.mxu0 0.0
    %212 = vmatpush.msra.mxu0 0.0
    %213 = vmatpush.msra.mxu0 0.0
    %214 = vmatpush.msra.mxu0 0.0
    %215 = vmatpush.msra.mxu0 0.0
    %216 = vmatpush.msra.mxu0 0.0
    %217 = vmatpush.msra.mxu0 0.0
    %218 = vmatpush.msra.mxu0 0.0
    %219 = vmatpush.msra.mxu0 %v56
    %220 = vmatpush.msra.mxu0 %v55
    %221 = vmatpush.msra.mxu0 %v54
    %222 = vmatpush.msra.mxu0 %v53
    %223 = vmatmul.f32.gmra.mxu0 %v205
    %v224 = vpop.f32.mrf.mxu0
    %v225 = vadd.f32 0.0, %v224
    %226 = vdwg.mxu0
    %v227 = vadd.f32 %v203, %v225
    %v228 = vtanh.pop %v227
    %s229 = scalar_lea.vmem [#allocation7], 40
    %230 = vst.msk [vmem:[%s229] sm:$0xff] %vm59, %v228
    %s231 = scalar_lea.vmem [#allocation2], 48
    %v232 = vld [vmem:[%s231] sm:$0xff]
    %v234 = vsel %vm59, %v228, 0
    %236 = vmatpush.msra.mxu0 0.0
    %237 = vmatpush.msra.mxu0 0.0
    %238 = vmatpush.msra.mxu0 0.0
    %239 = vmatpush.msra.mxu0 0.0
    %240 = vmatpush.msra.mxu0 0.0
    %241 = vmatpush.msra.mxu0 0.0
    %242 = vmatpush.msra.mxu0 0.0
    %243 = vmatpush.msra.mxu0 0.0
    %244 = vmatpush.msra.mxu0 0.0
    %245 = vmatpush.msra.mxu0 0.0
    %246 = vmatpush.msra.mxu0 0.0
    %247 = vmatpush.msra.mxu0 0.0
    %248 = vmatpush.msra.mxu0 %v56
    %249 = vmatpush.msra.mxu0 %v55
    %250 = vmatpush.msra.mxu0 %v54
    %251 = vmatpush.msra.mxu0 %v53
    %252 = vmatmul.f32.gmra.mxu0 %v234
    %v253 = vpop.f32.mrf.mxu0
    %v254 = vadd.f32 0.0, %v253
    %255 = vdwg.mxu0
    %v256 = vadd.f32 %v232, %v254
    %v257 = vtanh.pop %v256
    %s258 = scalar_lea.vmem [#allocation7], 48
    %259 = vst.msk [vmem:[%s258] sm:$0xff] %vm59, %v257
    %s260 = scalar_lea.vmem [#allocation2], 56
    %v261 = vld [vmem:[%s260] sm:$0xff]
    %v263 = vsel %vm59, %v257, 0
    %265 = vmatpush.msra.mxu0 0.0
    %266 = vmatpush.msra.mxu0 0.0
    %267 = vmatpush.msra.mxu0 0.0
    %268 = vmatpush.msra.mxu0 0.0
    %269 = vmatpush.msra.mxu0 0.0
    %270 = vmatpush.msra.mxu0 0.0
    %271 = vmatpush.msra.mxu0 0.0
    %272 = vmatpush.msra.mxu0 0.0
    %273 = vmatpush.msra.mxu0 0.0
    %274 = vmatpush.msra.mxu0 0.0
    %275 = vmatpush.msra.mxu0 0.0
    %276 = vmatpush.msra.mxu0 0.0
    %277 = vmatpush.msra.mxu0 %v56
    %278 = vmatpush.msra.mxu0 %v55
    %279 = vmatpush.msra.mxu0 %v54
    %280 = vmatpush.msra.mxu0 %v53
    %281 = vmatmul.f32.gmra.mxu0 %v263
    %v282 = vpop.f32.mrf.mxu0
    %v283 = vadd.f32 0.0, %v282
    %284 = vdwg.mxu0
    %v285 = vadd.f32 %v261, %v283
    %v286 = vtanh.pop %v285
    %s287 = scalar_lea.vmem [#allocation7], 56
    %288 = vst.msk [vmem:[%s287] sm:$0xff] %vm59, %v286
    %289 = vst.msk [vmem:[#allocation8] sm:$0xff] %vm59, %v286
    // Predicated region
    $region22: #{tpu_custom_call.1} parent=1 // pred_check
      _
    $region23: #{tpu_custom_call.1} parent=1 // pred_check_branch
      %291 = sbr.rel (0) target = $region25
    $region24: #{tpu_custom_call.1} parent=1 // pred_region
      %293 = vsyncadd [#allocation4], 0
      %s294 = sshll.u32 [#allocation7], 4
      %s295 = int_to_ptr.vmem [resolvable:$true] %s294
      %s296 = sshll.u32 %s2, 4
      %s297 = int_to_ptr.hbm [resolvable:$true] %s296
      %302 = dma.vmem_to_hbm [thread:$0]  %s295, 1024, %s297, [#allocation4], 128, 128, 8
    $region25: #{tpu_custom_call.1} parent=1 // pred_fallthru
      _
    // Predicated region
    $region26: #{tpu_custom_call.1} parent=1 // pred_check
      _
    $region27: #{tpu_custom_call.1} parent=1 // pred_check_branch
      %304 = sbr.rel (0) target = $region29
    $region28: #{tpu_custom_call.1} parent=1 // pred_region
      %306 = vsyncadd [#allocation9], 0
      %s308 = sshll.u32 [#allocation8], 4
      %s309 = int_to_ptr.vmem [resolvable:$true] %s308
      %s310 = sshll.u32 %s3, 4
      %s311 = int_to_ptr.hbm [resolvable:$true] %s310
      %313 = dma.vmem_to_hbm [thread:$0]  %s309, 128, %s311, [#allocation9]
    $region29: #{tpu_custom_call.1} parent=1 // pred_fallthru
      _
    // Predicated region
    $region30: #{tpu_custom_call.1} parent=1 // pred_check
      _
    $region31: #{tpu_custom_call.1} parent=1 // pred_check_branch
      %315 = sbr.rel (0) target = $region33
    $region32: #{tpu_custom_call.1} parent=1 // pred_region
      %317 = dma.done [#allocation4], 1024
    $region33: #{tpu_custom_call.1} parent=1 // pred_fallthru
      _
    // Predicated region
    $region34: #{tpu_custom_call.1} parent=1 // pred_check
      _
    $region35: #{tpu_custom_call.1} parent=1 // pred_check_branch
      %319 = sbr.rel (0) target = $region37
    $region36: #{tpu_custom_call.1} parent=1 // pred_region
      %321 = dma.done [#allocation9], 128
    $region37: #{tpu_custom_call.1} parent=1 // pred_fallthru
      _
    %322 = vsyncpa [#allocation3], 1
    %323 = vsyncpa [#allocation6], 1
    %324 = vsyncpa [#allocation4], 1
    %325 = vsyncpa [#allocation9], 1

</llo_original>
